<compile_context>
chip_gen: v7x
topology: tpu7x:2x2x1
jax: 0.10.0
libtpu: 0.0.40
codegen_flags: <defaults>
</compile_context>

<pallas_src>
import math

import numpy as np
import jax
import jax.numpy as jnp
from jax import lax
from jax.experimental import pallas as pl
from jax.experimental.pallas import tpu as pltpu


# ----------------------------------------------------------------------------
# Parameter construction (mirrors ConstantQTransform.__init__; deterministic)
# ----------------------------------------------------------------------------
def _next_power_of_two(n: int) -> int:
    return 1 << (int(n) - 1).bit_length()


def _round_up(v: int, m: int) -> int:
    return ((v + m - 1) // m) * m


def build_cqt_spectral(sample_rate, f_min, f_max, n_bin_per_octave):
    """Spectral CQT kernel exactly as in the PyTorch module (complex128)."""
    B = n_bin_per_octave
    Q = 1.0 / (2.0 ** (1.0 / B) - 1.0)
    K = math.ceil(B * math.log2(f_max / f_min))
    fft_length = _next_power_of_two(math.ceil(Q * sample_rate / f_min))

    temporal = np.zeros((K, fft_length), dtype=complex)
    for k in range(K):
        f_k = f_min * 2.0 ** (k / B)
        N_k = 2 * round(Q * sample_rate / f_k / 2) + 1
        n = np.arange(-(N_k - 1) // 2, (N_k - 1) // 2 + 1)
        w = np.hamming(N_k) / N_k
        s = fft_length // 2 + n[0]
        temporal[k, s:s + N_k] = w * np.exp(2 * np.pi * 1j * Q / N_k * n)
    spectral = np.fft.fft(temporal, axis=-1) / fft_length        # (K, L) complex128
    return spectral, fft_length, K


def fold_dft_into_kernel(spectral, fft_length, n_bins, lane_pad=128):
    """Fold the DFT into the CQT kernel in fp64:  FFT(frames) @ spectral.T == frames @ C
    with C[t, k] = FFT(spectral[k, :])[t].  Returns real (L, Kp) matrix [Re(C)|Im(C)|0],
    Kp a multiple of 128 so the kernel output is lane-dense."""
    folded = np.fft.fft(spectral, axis=-1).T                      # (L, K) complex128
    kp = _round_up(2 * n_bins, lane_pad)
    c = np.zeros((fft_length, kp), dtype=np.float32)
    c[:, :n_bins] = folded.real
    c[:, n_bins:2 * n_bins] = folded.imag
    return c, kp


def _choose_tile(n_items, fft_length):
    # Big tiles for MXU M-utilisation / low per-step overhead, but (a) keep the
    # (tm, L) frame tile well under VMEM and (b) keep >= ~4 grid steps so the
    # grid can be sharded across TensorCores (v7x megacore).
    tm = 512
    while tm > 8 and tm * fft_length * 4 > (8 << 20):
        tm //= 2
    while tm > 8 and n_items < 4 * tm:
        tm //= 2
    return tm


# ----------------------------------------------------------------------------
# Pallas kernels
# ----------------------------------------------------------------------------
def cqt_pallas_stream(y, c_fold, *, fft_length, frame_period, tm):
    """y: (batch, rows, P) f32 rows (width=frame_period) of the padded signal.
    Returns (batch, n_tiles*tm, Kp) = [Re | Im | pad] of the CQT output."""
    batch, rows, P = y.shape
    L = fft_length
    r = L // P
    Kp = c_fold.shape[1]
    n_tiles = rows // tm - 1                      # rows == (n_tiles + 1) * tm

    def kernel(y0_ref, y1_ref, c_ref, out_ref, win_ref, frm_ref):
        # Stage a (2*tm, P) signal-row window from two adjacent, auto-pipelined tiles.
        win_ref[0:tm, :] = y0_ref[0]
        win_ref[tm:2 * tm, :] = y1_ref[0]
        # Rebuild the (tm, L) overlapping-frame tile with static shifted slices:
        #   frame j = concat_b  xp[(j + b) * P : (j + b + 1) * P]
        for b in range(r):
            frm_ref[:, b * P:(b + 1) * P] = win_ref[b:b + tm, :]
        # Single MXU matmul against the folded (DFT @ CQT) kernel; lane-dense output.
        out_ref[0] = jnp.dot(frm_ref[...], c_ref[...],
                             preferred_element_type=jnp.float32)

    return pl.pallas_call(
        kernel,
        out_shape=jax.ShapeDtypeStruct((batch, n_tiles * tm, Kp), jnp.float32),
        grid_spec=pltpu.PrefetchScalarGridSpec(
            num_scalar_prefetch=0,
            grid=(batch, n_tiles),
            in_specs=[
                pl.BlockSpec((1, tm, P), lambda b, i: (b, i, 0)),      # rows [i*tm, (i+1)*tm)
                pl.BlockSpec((1, tm, P), lambda b, i: (b, i + 1, 0)),  # next tm rows (overlap)
                pl.BlockSpec((L, Kp), lambda b, i: (0, 0)),            # folded kernel, resident
            ],
            out_specs=pl.BlockSpec((1, tm, Kp), lambda b, i: (b, i, 0)),
            scratch_shapes=[
                pltpu.VMEM((2 * tm, P), jnp.float32),   # signal-row window
                pltpu.VMEM((tm, L), jnp.float32),       # rebuilt frame tile
            ],
        ),
        compiler_params=pltpu.CompilerParams(
            dimension_semantics=("parallel", "parallel")),
    )(y, y, c_fold)


def cqt_pallas_frames(frames, c_fold, *, tm):
    """Fallback: frames (M, L) f32 already materialised -> (M, Kp) = [Re | Im | pad]."""
    M, L = frames.shape
    Kp = c_fold.shape[1]
    assert M % tm == 0

    def kernel(f_ref, c_ref, out_ref):
        out_ref[...] = jnp.dot(f_ref[...], c_ref[...],
                               preferred_element_type=jnp.float32)

    return pl.pallas_call(
        kernel,
        out_shape=jax.ShapeDtypeStruct((M, Kp), jnp.float32),
        grid_spec=pltpu.PrefetchScalarGridSpec(
            num_scalar_prefetch=0,
            grid=(M // tm,),
            in_specs=[
                pl.BlockSpec((tm, L), lambda i: (i, 0)),
                pl.BlockSpec((L, Kp), lambda i: (0, 0)),
            ],
            out_specs=pl.BlockSpec((tm, Kp), lambda i: (i, 0)),
        ),
        compiler_params=pltpu.CompilerParams(dimension_semantics=("parallel",)),
    )(frames, c_fold)


# ----------------------------------------------------------------------------
# Framing (diffsptk Frame, center=True) — plain JAX, used by fallback & reference
# ----------------------------------------------------------------------------
def frame_signal(x, frame_length, frame_period):
    left = frame_length // 2
    right = (frame_length - 1) // 2
    pad = [(0, 0)] * (x.ndim - 1) + [(left, right)]
    xp = jnp.pad(x, pad)
    T = x.shape[-1]
    n_frames = (T - 1) // frame_period + 1
    starts = jnp.arange(n_frames) * frame_period
    idx = starts[:, None] + jnp.arange(frame_length)[None, :]     # (N, L)
    return xp[..., idx]                                           # (..., N, L)


# ----------------------------------------------------------------------------
# Module wrapper
# ----------------------------------------------------------------------------
class ConstantQTransformPallas:
    def __init__(self, frame_period, sample_rate, f_min=32.7, f_max=None,
                 n_bin_per_octave=12):
        if f_max is None:
            f_max = sample_rate / 2
        assert 0 < f_min < f_max <= sample_rate / 2
        assert 1 <= n_bin_per_octave
        assert 1 <= frame_period
        spectral, L, K = build_cqt_spectral(sample_rate, f_min, f_max, n_bin_per_octave)
        c_fold, Kp = fold_dft_into_kernel(spectral, L, K)
        self.frame_period = int(frame_period)
        self.fft_length = L
        self.n_bins = K
        self.kp = Kp
        self.c_fold = jnp.asarray(c_fold)                                   # (L, Kp) f32
        # complex64 spectral kernel, kept only for the pure-JAX reference check
        self.kernel_complex = jnp.asarray(spectral.T.astype(np.complex64))  # (L, K)

    def __call__(self, x):
        x = jnp.asarray(x, jnp.float32)
        lead, T = x.shape[:-1], x.shape[-1]
        x2 = x.reshape(-1, T)
        batch = x2.shape[0]
        L, P, K = self.fft_length, self.frame_period, self.n_bins
        N = (T - 1) // P + 1
        left = L // 2

        if L % P == 0 and (L // P) <= 64:
            # Streaming path: never materialise the overlapping (..., N, L) frames
            # array in HBM; the kernel rebuilds each (tm, L) frame tile in VMEM from
            # contiguous signal rows of width P.
            r = L // P
            tm = max(_choose_tile(N, L), _round_up(r, 8))
            n_tiles = -(-N // tm)
            rows = (n_tiles + 1) * tm
            xp = jnp.pad(x2, ((0, 0), (left, rows * P - left - T)))
            y = xp.reshape(batch, rows, P)
            out = cqt_pallas_stream(y, self.c_fold, fft_length=L,
                                    frame_period=P, tm=tm)
            out = out[:, :N, :]                                   # (batch, N, Kp)
        else:
            # Fallback: materialised frames (frame_period does not divide fft_length).
            frames = frame_signal(x2, L, P).reshape(-1, L)
            M = frames.shape[0]
            tm = _choose_tile(M, L)
            Mp = _round_up(M, tm)
            frames = jnp.pad(frames, ((0, Mp - M), (0, 0)))
            out = cqt_pallas_frames(frames, self.c_fold, tm=tm)
            out = out[:M].reshape(batch, N, self.kp)              # (batch, N, Kp)

        X = lax.complex(out[..., :K], out[..., K:2 * K])          # complex64
        return X.reshape(*lead, N, K)

    def reference(self, x):
        # Pure-JAX reference matching the torch module: frame -> FFT -> complex matmul.
        frames = frame_signal(jnp.asarray(x, jnp.float32), self.fft_length,
                              self.frame_period)
        Xf = jnp.fft.fft(frames, axis=-1)
        return jnp.matmul(Xf.astype(jnp.complex64), self.kernel_complex)


# ----------------------------------------------------------------------------
# Demo / correctness check
# ----------------------------------------------------------------------------
if __name__ == "__main__":
    key = jax.random.PRNGKey(0)
    x = jax.random.normal(key, (2, 64), dtype=jnp.float32)        # (batch, T)

    def check(cqt, sig, tol=1e-3):
        X = jax.block_until_ready(cqt(sig))
        X_ref = jax.block_until_ready(cqt.reference(sig))
        assert X.shape == X_ref.shape, (X.shape, X_ref.shape)
        assert X.dtype == jnp.complex64
        err = float(jnp.max(jnp.abs(X - X_ref)))
        scale = float(jnp.max(jnp.abs(X_ref))) + 1e-12
        if err / scale > tol:
            raise AssertionError(f"Pallas CQT mismatch: max abs err {err}, scale {scale}")

    # Streaming path (frame_period | fft_length): fft_length = 128, K = 12.
    check(ConstantQTransformPallas(16, 8000, 500.0, 4000.0, n_bin_per_octave=4), x)
    # Fallback path (frame_period does not divide fft_length).
    check(ConstantQTransformPallas(10, 8000, 500.0, 4000.0, n_bin_per_octave=4), x)

    print("KERNEL_OK")
</pallas_src>

<mosaic_0001>
module attributes {stable_mosaic.version = 11 : i64} {
  func.func @kernel(%arg0: i32, %arg1: i32, %arg2: memref<1x8x16xf32, #tpu.memory_space<vmem>>, %arg3: memref<1x8x16xf32, #tpu.memory_space<vmem>>, %arg4: memref<128x128xf32, #tpu.memory_space<vmem>>, %arg5: memref<1x8x128xf32, #tpu.memory_space<vmem>>, %arg6: memref<16x16xf32, #tpu.memory_space<vmem>>, %arg7: memref<8x128xf32, #tpu.memory_space<vmem>>) attributes {dimension_semantics = [#tpu.dimension_semantics<parallel>, #tpu.dimension_semantics<parallel>], iteration_bounds = array<i64: 2, 1>, scalar_prefetch = 0 : i64, scratch_operands = 2 : i64, tpu.core_type = #tpu.core_type<tc>, window_params = [{transform_indices = @transform_0, window_bounds = array<i64: 1, 8, 16>}, {transform_indices = @transform_1, window_bounds = array<i64: 1, 8, 16>}, {pipeline_mode = #tpu.pipeline_mode<synchronous>, transform_indices = @transform_2, window_bounds = array<i64: 128, 128>}, {transform_indices = @transform_3, window_bounds = array<i64: 1, 8, 128>}]} {
    %c0 = arith.constant 0 : index
    %c0_0 = arith.constant 0 : index
    %c0_1 = arith.constant 0 : index
    %0 = vector.load %arg2[%c0, %c0_0, %c0_1] : memref<1x8x16xf32, #tpu.memory_space<vmem>>, vector<1x8x16xf32>
    %1 = vector.shape_cast %0 : vector<1x8x16xf32> to vector<8x16xf32>
    %c0_2 = arith.constant 0 : index
    %c0_3 = arith.constant 0 : index
    %2 = vector.load %arg6[%c0_2, %c0_3] : memref<16x16xf32, #tpu.memory_space<vmem>>, vector<8x16xf32>
    tpu.vector_store %arg6[%c0_2, %c0_3], %1 {strides = array<i32>} : memref<16x16xf32, #tpu.memory_space<vmem>>, vector<8x16xf32>,
    %c0_4 = arith.constant 0 : index
    %c0_5 = arith.constant 0 : index
    %c0_6 = arith.constant 0 : index
    %3 = vector.load %arg3[%c0_4, %c0_5, %c0_6] : memref<1x8x16xf32, #tpu.memory_space<vmem>>, vector<1x8x16xf32>
    %4 = vector.shape_cast %3 : vector<1x8x16xf32> to vector<8x16xf32>
    %c8 = arith.constant 8 : index
    %c0_7 = arith.constant 0 : index
    %5 = vector.load %arg6[%c8, %c0_7] : memref<16x16xf32, #tpu.memory_space<vmem>>, vector<8x16xf32>
    tpu.vector_store %arg6[%c8, %c0_7], %4 {strides = array<i32>} : memref<16x16xf32, #tpu.memory_space<vmem>>, vector<8x16xf32>,
    %c0_8 = arith.constant 0 : index
    %c0_9 = arith.constant 0 : index
    %6 = vector.load %arg6[%c0_8, %c0_9] : memref<16x16xf32, #tpu.memory_space<vmem>>, vector<8x16xf32>
    %c0_10 = arith.constant 0 : index
    %c0_11 = arith.constant 0 : index
    %7 = vector.load %arg7[%c0_10, %c0_11] : memref<8x128xf32, #tpu.memory_space<vmem>>, vector<8x16xf32>
    tpu.vector_store %arg7[%c0_10, %c0_11], %6 {strides = array<i32>} : memref<8x128xf32, #tpu.memory_space<vmem>>, vector<8x16xf32>,
    %c1 = arith.constant 1 : index
    %c0_12 = arith.constant 0 : index
    %8 = vector.load %arg6[%c1, %c0_12] : memref<16x16xf32, #tpu.memory_space<vmem>>, vector<8x16xf32>
    %c0_13 = arith.constant 0 : index
    %c16 = arith.constant 16 : index
    %9 = vector.load %arg7[%c0_13, %c16] : memref<8x128xf32, #tpu.memory_space<vmem>>, vector<8x16xf32>
    tpu.vector_store %arg7[%c0_13, %c16], %8 {strides = array<i32>} : memref<8x128xf32, #tpu.memory_space<vmem>>, vector<8x16xf32>,
    %c2 = arith.constant 2 : index
    %c0_14 = arith.constant 0 : index
    %10 = vector.load %arg6[%c2, %c0_14] : memref<16x16xf32, #tpu.memory_space<vmem>>, vector<8x16xf32>
    %c0_15 = arith.constant 0 : index
    %c32 = arith.constant 32 : index
    %11 = vector.load %arg7[%c0_15, %c32] : memref<8x128xf32, #tpu.memory_space<vmem>>, vector<8x16xf32>
    tpu.vector_store %arg7[%c0_15, %c32], %10 {strides = array<i32>} : memref<8x128xf32, #tpu.memory_space<vmem>>, vector<8x16xf32>,
    %c3 = arith.constant 3 : index
    %c0_16 = arith.constant 0 : index
    %12 = vector.load %arg6[%c3, %c0_16] : memref<16x16xf32, #tpu.memory_space<vmem>>, vector<8x16xf32>
    %c0_17 = arith.constant 0 : index
    %c48 = arith.constant 48 : index
    %13 = vector.load %arg7[%c0_17, %c48] : memref<8x128xf32, #tpu.memory_space<vmem>>, vector<8x16xf32>
    tpu.vector_store %arg7[%c0_17, %c48], %12 {strides = array<i32>} : memref<8x128xf32, #tpu.memory_space<vmem>>, vector<8x16xf32>,
    %c4 = arith.constant 4 : index
    %c0_18 = arith.constant 0 : index
    %14 = vector.load %arg6[%c4, %c0_18] : memref<16x16xf32, #tpu.memory_space<vmem>>, vector<8x16xf32>
    %c0_19 = arith.constant 0 : index
    %c64 = arith.constant 64 : index
    %15 = vector.load %arg7[%c0_19, %c64] : memref<8x128xf32, #tpu.memory_space<vmem>>, vector<8x16xf32>
    tpu.vector_store %arg7[%c0_19, %c64], %14 {strides = array<i32>} : memref<8x128xf32, #tpu.memory_space<vmem>>, vector<8x16xf32>,
    %c5 = arith.constant 5 : index
    %c0_20 = arith.constant 0 : index
    %16 = vector.load %arg6[%c5, %c0_20] : memref<16x16xf32, #tpu.memory_space<vmem>>, vector<8x16xf32>
    %c0_21 = arith.constant 0 : index
    %c80 = arith.constant 80 : index
    %17 = vector.load %arg7[%c0_21, %c80] : memref<8x128xf32, #tpu.memory_space<vmem>>, vector<8x16xf32>
    tpu.vector_store %arg7[%c0_21, %c80], %16 {strides = array<i32>} : memref<8x128xf32, #tpu.memory_space<vmem>>, vector<8x16xf32>,
    %c6 = arith.constant 6 : index
    %c0_22 = arith.constant 0 : index
    %18 = vector.load %arg6[%c6, %c0_22] : memref<16x16xf32, #tpu.memory_space<vmem>>, vector<8x16xf32>
    %c0_23 = arith.constant 0 : index
    %c96 = arith.constant 96 : index
    %19 = vector.load %arg7[%c0_23, %c96] : memref<8x128xf32, #tpu.memory_space<vmem>>, vector<8x16xf32>
    tpu.vector_store %arg7[%c0_23, %c96], %18 {strides = array<i32>} : memref<8x128xf32, #tpu.memory_space<vmem>>, vector<8x16xf32>,
    %c7 = arith.constant 7 : index
    %c0_24 = arith.constant 0 : index
    %20 = vector.load %arg6[%c7, %c0_24] : memref<16x16xf32, #tpu.memory_space<vmem>>, vector<8x16xf32>
    %c0_25 = arith.constant 0 : index
    %c112 = arith.constant 112 : index
    %21 = vector.load %arg7[%c0_25, %c112] : memref<8x128xf32, #tpu.memory_space<vmem>>, vector<8x16xf32>
    tpu.vector_store %arg7[%c0_25, %c112], %20 {strides = array<i32>} : memref<8x128xf32, #tpu.memory_space<vmem>>, vector<8x16xf32>,
    %c0_26 = arith.constant 0 : index
    %c0_27 = arith.constant 0 : index
    %22 = vector.load %arg7[%c0_26, %c0_27] : memref<8x128xf32, #tpu.memory_space<vmem>>, vector<8x128xf32>
    %c0_28 = arith.constant 0 : index
    %c0_29 = arith.constant 0 : index
    %23 = vector.load %arg4[%c0_28, %c0_29] : memref<128x128xf32, #tpu.memory_space<vmem>>, vector<128x128xf32>
    %cst = arith.constant dense<0.000000e+00> : vector<8x128xf32>
    %24 = tpu.matmul %22, %23, %cst {dimension_numbers = #tpu.dot_dimension_numbers<[1], [0], [0], [1], [0, 0, 1, 1], [], []>} : vector<8x128xf32>, vector<128x128xf32>, vector<8x128xf32> -> vector<8x128xf32>
    %c0_30 = arith.constant 0 : index
    %c0_31 = arith.constant 0 : index
    %c0_32 = arith.constant 0 : index
    %25 = vector.load %arg5[%c0_30, %c0_31, %c0_32] : memref<1x8x128xf32, #tpu.memory_space<vmem>>, vector<1x8x128xf32>
    %26 = vector.shape_cast %25 : vector<1x8x128xf32> to vector<8x128xf32>
    %27 = vector.shape_cast %24 : vector<8x128xf32> to vector<1x8x128xf32>
    tpu.vector_store %arg5[%c0_30, %c0_31, %c0_32], %27 {strides = array<i32>} : memref<1x8x128xf32, #tpu.memory_space<vmem>>, vector<1x8x128xf32>,
    return
  }
  func.func @transform_0(%arg0: i32, %arg1: i32) -> (i32, i32, i32) {
    %c0_i32 = arith.constant 0 : i32
    %c0_i32_0 = arith.constant 0 : i32
    return %arg0, %arg1, %c0_i32 : i32, i32, i32
  }
  func.func @transform_1(%arg0: i32, %arg1: i32) -> (i32, i32, i32) {
    %c1_i32 = arith.constant 1 : i32
    %0 = arith.addi %arg1, %c1_i32 : i32
    %c0_i32 = arith.constant 0 : i32
    %c0_i32_0 = arith.constant 0 : i32
    return %arg0, %0, %c0_i32 : i32, i32, i32
  }
  func.func @transform_2(%arg0: i32, %arg1: i32) -> (i32, i32) {
    %c0_i32 = arith.constant 0 : i32
    %c0_i32_0 = arith.constant 0 : i32
    %c0_i32_1 = arith.constant 0 : i32
    return %c0_i32, %c0_i32_0 : i32, i32
  }
  func.func @transform_3(%arg0: i32, %arg1: i32) -> (i32, i32, i32) {
    %c0_i32 = arith.constant 0 : i32
    %c0_i32_0 = arith.constant 0 : i32
    return %arg0, %arg1, %c0_i32 : i32, i32, i32
  }
}

</mosaic_0001>

<llo_original>
// kernel: tpu_custom_call.1
$region0: #{tpu_custom_call.1}
  #allocation0 [shape = 'u32[]', space=smem, size = 0x4, offset = 0x4, fixed_abs, tag = 'smem constant byte address 0x4 - core index']
  #allocation1 [shape = 'u32[144,128]{1,0:T(1,128)}', space=vmem, size = 0x12000, scoped, tag = 'internal scratch']
  #allocation2 [shape = 'f32[16,16]{1,0:T(8,128)}', space=vmem, size = 0x2000, scoped, tag = 'scratch operand']
  #allocation3 [shape = 'f32[8,128]{1,0:T(8,128)}', space=vmem, size = 0x1000, scoped, tag = 'scratch operand']
  %s0 = inlined_call_operand.hbm [shape: f32[2,16,16], index: 0, kind: input, shape index: {}]
  %s1 = inlined_call_operand.hbm [shape: f32[2,16,16], index: 1, kind: input, shape index: {}]
  %s2 = inlined_call_operand.hbm [shape: f32[128,128], index: 2, kind: input, shape index: {}]
  %s3 = inlined_call_operand.hbm [shape: f32[2,8,128], index: 3, kind: output, shape index: {}]
  %s4 = sld [smem:[#allocation0]]
  $region57: #{tpu_custom_call.1} parent=0
    _
  %s6 = ssub.s32 1, %s4
  %s7 = scalar_select 0, %s6, %s4
  $region1: #{tpu_custom_call.1} parent=0
    #allocation4 [shape = 'u8[8192]{0}', space=vmem, size = 0x2000, scoped, tag = 'input window, operand 0']
    #allocation5 [shape = 's32[2]{0}', space=sflag, size = 0x8, scoped, tag = 'scoped memory for tpu_custom_call.1']
    #allocation6 [shape = 's32[2]{0}', space=sflag, size = 0x8, scoped, tag = 'scoped memory for tpu_custom_call.1']
    #allocation7 [shape = 'u8[8192]{0}', space=vmem, size = 0x2000, scoped, tag = 'input window, operand 1']
    #allocation8 [shape = 's32[2]{0}', space=sflag, size = 0x8, scoped, tag = 'scoped memory for tpu_custom_call.1']
    #allocation9 [shape = 'u8[65536]{0}', space=vmem, size = 0x10000, scoped, tag = 'input window, operand 2, single buffered']
    #allocation10 [shape = 'u8[8192]{0}', space=vmem, size = 0x2000, scoped, tag = 'output window, operand 0']
    %8 = vsyncpa [#allocation5], 0
    %s9 = scalar_lea.sflag [#allocation5], 1
    %10 = vsyncpa %s9, 0
    %11 = vsyncpa [#allocation8], 0
    %s12 = scalar_lea.sflag [#allocation8], 1
    %13 = vsyncpa %s12, 0
    %14 = vsyncpa [#allocation6], 0
    %s15 = scalar_lea.sflag [#allocation6], 1
    %16 = vsyncpa %s15, 0
    loop: start=0, step=1, limit=4
    $region2: #{tpu_custom_call.1} parent=1 // loop_pre_header
      _
    $region3: #{tpu_custom_call.1} parent=1 // loop_header
      %s18 = sphi 0, %s22
      %p19 = scmp.ge.s32.totalorder %s18, 4
      %s25 = sphi 0, %s37
      %s26 = sphi 0, %s33
      %s27 = sphi 0, %s25
      %s28 = sphi 0, %s26
      %s29 = sphi 0, %s27
      %s30 = sphi 0, %s28
      %s42 = sphi 0, %s44
      %s45 = sphi 0, %s42
      %s46 = sphi 0, %s45
      %s62 = sphi 0, %s46
      %s72 = sphi 0, %s74
      %s75 = sphi 0, %s72
      %s76 = sphi 0, %s75
      %s92 = sphi 0, %s76
      %s96 = sphi 0, %s96
      %s98 = sphi 0, %s96
      %s99 = sphi 0, %s98
      %s113 = sphi 0, %s99
      %s121 = sphi 0, %s123
      %s124 = sphi 0, %s121
      %s125 = sphi 0, %s124
      %s141 = sphi 0, %s125
    $region4: #{tpu_custom_call.1} parent=1 // loop_header_branch
      %21 = sbr.rel (%p19) target = $region8
    $region5: #{tpu_custom_call.1} parent=1 // loop_body
      %s23 = ssub.s32 %s18, 1
      %s24 = ssub.s32 %s18, 2
      %s31 = sadd.s32 1, %s26
      %p32 = scmp.ge.s32.totalorder %s31, 1
      %s33 = scalar_select %p32, 0, %s31
      %s34 = sadd.s32 1, %s25
      %s35 = scalar_select %p32, %s34, %s25
      %p36 = scmp.ge.s32.totalorder %s35, 2
      %s37 = scalar_select %p36, 0, %s35
      %s38 = ssub.s32 %s25, %s37
      %s39 = ssub.s32 %s26, %s33
      %s40 = sor.u32 %s38, %s39
      %p41 = scmp.eq.s32.totalorder %s40, 0
      %s43 = sadd.s32 %s42, 1
      %s44 = scalar_select %p41, %s42, %s43
      %p47 = pneg %p41
      %p48 = scmp.eq.s32.totalorder %s18, 1
      %p49 = por %p47, %p48
      %p50 = scmp.ne.s32.totalorder %s42, %s45
      %p51 = scmp.eq.s32.totalorder %s18, 0
      %p52 = por %p50, %p51
      %p53 = scmp.ne.s32.totalorder %s42, %s45
      %p54 = scmp.eq.s32.totalorder %s23, 1
      %p55 = por %p53, %p54
      %p56 = scmp.ne.s32.totalorder %s45, %s46
      %p57 = scmp.eq.s32.totalorder %s23, 0
      %p58 = por %p56, %p57
      %p59 = scmp.ne.s32.totalorder %s45, %s46
      %p60 = scmp.eq.s32.totalorder %s24, 1
      %p61 = por %p59, %p60
      %p63 = scmp.ne.s32.totalorder %s46, %s62
      %p64 = scmp.eq.s32.totalorder %s24, 0
      %p65 = por %p63, %p64
      %s66 = sadd.s32 %s26, 1
      %s67 = sadd.s32 %s33, 1
      %s68 = ssub.s32 %s25, %s37
      %s69 = ssub.s32 %s66, %s67
      %s70 = sor.u32 %s68, %s69
      %p71 = scmp.eq.s32.totalorder %s70, 0
      %s73 = sadd.s32 %s72, 1
      %s74 = scalar_select %p71, %s72, %s73
      %p77 = pneg %p71
      %p78 = scmp.eq.s32.totalorder %s18, 1
      %p79 = por %p77, %p78
      %p80 = scmp.ne.s32.totalorder %s72, %s75
      %p81 = scmp.eq.s32.totalorder %s18, 0
      %p82 = por %p80, %p81
      %p83 = scmp.ne.s32.totalorder %s72, %s75
      %p84 = scmp.eq.s32.totalorder %s23, 1
      %p85 = por %p83, %p84
      %p86 = scmp.ne.s32.totalorder %s75, %s76
      %p87 = scmp.eq.s32.totalorder %s23, 0
      %p88 = por %p86, %p87
      %p89 = scmp.ne.s32.totalorder %s75, %s76
      %p90 = scmp.eq.s32.totalorder %s24, 1
      %p91 = por %p89, %p90
      %p93 = scmp.ne.s32.totalorder %s76, %s92
      %p94 = scmp.eq.s32.totalorder %s24, 0
      %p95 = por %p93, %p94
      %s97 = sadd.s32 %s96, 1
      %p100 = scmp.eq.s32.totalorder %s18, 1
      %p101 = scmp.ne.s32.totalorder %s96, %s98
      %p102 = scmp.eq.s32.totalorder %s18, 0
      %p103 = por %p101, %p102
      %p104 = scmp.ne.s32.totalorder %s96, %s98
      %p105 = scmp.eq.s32.totalorder %s23, 1
      %p106 = por %p104, %p105
      %p107 = scmp.ne.s32.totalorder %s98, %s99
      %p108 = scmp.eq.s32.totalorder %s23, 0
      %p109 = por %p107, %p108
      %p110 = scmp.ne.s32.totalorder %s98, %s99
      %p111 = scmp.eq.s32.totalorder %s24, 1
      %p112 = por %p110, %p111
      %p114 = scmp.ne.s32.totalorder %s99, %s113
      %p115 = scmp.eq.s32.totalorder %s24, 0
      %p116 = por %p114, %p115
      %s117 = ssub.s32 %s25, %s37
      %s118 = ssub.s32 %s26, %s33
      %s119 = sor.u32 %s117, %s118
      %p120 = scmp.eq.s32.totalorder %s119, 0
      %s122 = sadd.s32 %s121, 1
      %s123 = scalar_select %p120, %s121, %s122
      %p126 = pneg %p120
      %p127 = scmp.eq.s32.totalorder %s18, 1
      %p128 = por %p126, %p127
      %p129 = scmp.ne.s32.totalorder %s121, %s124
      %p130 = scmp.eq.s32.totalorder %s18, 0
      %p131 = por %p129, %p130
      %p132 = scmp.ne.s32.totalorder %s121, %s124
      %p133 = scmp.eq.s32.totalorder %s23, 1
      %p134 = por %p132, %p133
      %p135 = scmp.ne.s32.totalorder %s124, %s125
      %p136 = scmp.eq.s32.totalorder %s23, 0
      %p137 = por %p135, %p136
      %p138 = scmp.ne.s32.totalorder %s124, %s125
      %p139 = scmp.eq.s32.totalorder %s24, 1
      %p140 = por %p138, %p139
      %p142 = scmp.ne.s32.totalorder %s125, %s141
      %p143 = scmp.eq.s32.totalorder %s24, 0
      %p144 = por %p142, %p143
      %p145 = scmp.le.s32.totalorder 1, %s18
      %p146 = scmp.lt.s32.totalorder %s18, 3
      %p147 = pnand %p145, %p146
      %p148 = pneg %p147
      // Predicated region
      $region9: #{tpu_custom_call.1} parent=5 // pred_check
        _
      $region10: #{tpu_custom_call.1} parent=5 // pred_check_branch
        %150 = sbr.rel (%p147) target = $region12
      $region11: #{tpu_custom_call.1} parent=5 // pred_region
        %s151 = ssub.s32 %s18, 1
        // Predicated region
        $region13: #{tpu_custom_call.1} parent=11 // pred_check
          %p152 = pneg %p109
        $region14: #{tpu_custom_call.1} parent=11 // pred_check_branch
          %154 = sbr.rel (%p152) target = $region16
        $region15: #{tpu_custom_call.1} parent=11 // pred_region
          %s156 = ssub.s32 2048, 2048
          %157 = vsyncadd [#allocation8], %s156
          %s158 = sshll.u32 [#allocation9], 4
          %s159 = int_to_ptr.vmem [resolvable:$true] %s158
          %164 = dma.hbm_to_vmem [thread:$0]  %s2, 2048, %s159, [#allocation8], 128, 128, 8
        $region16: #{tpu_custom_call.1} parent=11 // pred_fallthru
          _
      $region12: #{tpu_custom_call.1} parent=5 // pred_fallthru
        _
      %p165 = scmp.lt.s32.totalorder %s18, 2
      // Predicated region
      $region17: #{tpu_custom_call.1} parent=5 // pred_check
        %p166 = pneg %p165
      $region18: #{tpu_custom_call.1} parent=5 // pred_check_branch
        %168 = sbr.rel (%p166) target = $region20
      $region19: #{tpu_custom_call.1} parent=5 // pred_region
        // Predicated region
        $region21: #{tpu_custom_call.1} parent=19 // pred_check
          %p169 = pneg %p52
        $region22: #{tpu_custom_call.1} parent=19 // pred_check_branch
          %171 = sbr.rel (%p169) target = $region24
        $region23: #{tpu_custom_call.1} parent=19 // pred_region
          %s172 = sand.u32 %s42, 1
          %s173 = scalar_lea.sflag [#allocation5], %s172
          %s174 = sand.u32 %s42, 1
          %s175 = smul.addr %s174, 8
          %s176 = scalar_lea.vmem [#allocation4], %s175
          %s178 = ssub.s32 128, 128
          %179 = vsyncadd %s173, %s178
          %s180 = smul.addr %s25, 2
          %s181 = sadd.s32 %s26, %s180
          %s182 = smul.addr %s181, 128
          %s183 = scalar_lea.hbm %s0, %s182
          %s185 = sshll.u32 %s176, 4
          %s186 = int_to_ptr.vmem [resolvable:$true] %s185
          %188 = dma.hbm_to_vmem [thread:$0]  %s183, 128, %s186, %s173
        $region24: #{tpu_custom_call.1} parent=19 // pred_fallthru
          _
        // Predicated region
        $region25: #{tpu_custom_call.1} parent=19 // pred_check
          %p189 = pneg %p82
        $region26: #{tpu_custom_call.1} parent=19 // pred_check_branch
          %191 = sbr.rel (%p189) target = $region28
        $region27: #{tpu_custom_call.1} parent=19 // pred_region
          %s192 = sand.u32 %s18, 1
          %s193 = scalar_lea.sflag [#allocation8], %s192
          %s194 = sand.u32 %s72, 1
          %s195 = smul.addr %s194, 8
          %s196 = scalar_lea.vmem [#allocation7], %s195
          %s197 = sadd.s32 %s26, 1
          %s199 = ssub.s32 128, 128
          %200 = vsyncadd %s193, %s199
          %s201 = smul.addr %s25, 2
          %s202 = sadd.s32 %s197, %s201
          %s203 = smul.addr %s202, 128
          %s204 = scalar_lea.hbm %s1, %s203
          %s206 = sshll.u32 %s196, 4
          %s207 = int_to_ptr.vmem [resolvable:$true] %s206
          %209 = dma.hbm_to_vmem [thread:$0]  %s204, 128, %s207, %s193
        $region28: #{tpu_custom_call.1} parent=19 // pred_fallthru
          _
      $region20: #{tpu_custom_call.1} parent=5 // pred_fallthru
        _
      %p210 = scmp.le.s32.totalorder 1, %s18
      %p211 = scmp.lt.s32.totalorder %s18, 3
      %p212 = pnand %p210, %p211
      %p213 = pneg %p212
      // Predicated region
      $region29: #{tpu_custom_call.1} parent=5 // pred_check
        _
      $region30: #{tpu_custom_call.1} parent=5 // pred_check_branch
        %215 = sbr.rel (%p212) target = $region32
      $region31: #{tpu_custom_call.1} parent=5 // pred_region
        %s216 = ssub.s32 %s18, 1
        %s217 = sand.u32 %s45, 1
        %s218 = scalar_lea.sflag [#allocation5], %s217
        %s219 = sand.u32 %s45, 1
        %s220 = smul.addr %s219, 8
        %s221 = scalar_lea.vmem [#allocation4], %s220
        // Predicated region
        $region33: #{tpu_custom_call.1} parent=31 // pred_check
          %p222 = pneg %p58
        $region34: #{tpu_custom_call.1} parent=31 // pred_check_branch
          %224 = sbr.rel (%p222) target = $region36
        $region35: #{tpu_custom_call.1} parent=31 // pred_region
          %225 = dma.done %s218, 128
        $region36: #{tpu_custom_call.1} parent=31 // pred_fallthru
          _
        %s226 = sand.u32 %s23, 1
        %s227 = scalar_lea.sflag [#allocation8], %s226
        %s228 = sand.u32 %s75, 1
        %s229 = smul.addr %s228, 8
        %s230 = scalar_lea.vmem [#allocation7], %s229
        // Predicated region
        $region37: #{tpu_custom_call.1} parent=31 // pred_check
          %p231 = pneg %p88
        $region38: #{tpu_custom_call.1} parent=31 // pred_check_branch
          %233 = sbr.rel (%p231) target = $region40
        $region39: #{tpu_custom_call.1} parent=31 // pred_region
          %234 = dma.done %s227, 128
        $region40: #{tpu_custom_call.1} parent=31 // pred_fallthru
          _
        // Predicated region
        $region41: #{tpu_custom_call.1} parent=31 // pred_check
          %p235 = pneg %p109
        $region42: #{tpu_custom_call.1} parent=31 // pred_check_branch
          %237 = sbr.rel (%p235) target = $region44
        $region43: #{tpu_custom_call.1} parent=31 // pred_region
          %238 = dma.done [#allocation8], 2048
        $region44: #{tpu_custom_call.1} parent=31 // pred_fallthru
          _
        %s239 = sand.u32 %s45, 1
        %s240 = scalar_lea.sflag [#allocation5], %s239
        %s241 = sand.u32 %s45, 1
        %s242 = smul.addr %s241, 8
        %s243 = scalar_lea.vmem [#allocation4], %s242
        %p244 = pneg %p58
        %p245 = pneg %p55
        %s246 = sand.u32 %s23, 1
        %s247 = scalar_lea.sflag [#allocation8], %s246
        %s248 = sand.u32 %s75, 1
        %s249 = smul.addr %s248, 8
        %s250 = scalar_lea.vmem [#allocation7], %s249
        %p251 = pneg %p88
        %p252 = pneg %p85
        %p253 = pneg %p109
        %p254 = pneg %p106
        %p255 = pneg %p137
        %p256 = pneg %p134
        %s257 = sand.u32 %s124, 1
        %s258 = scalar_lea.sflag [#allocation6], %s257
        %s259 = sand.u32 %s124, 1
        %s260 = smul.addr %s259, 8
        %s261 = scalar_lea.vmem [#allocation10], %s260
        %s262 = sadd.s32 %s28, 1
        %v263 = vld [vmem:[%s221] sm:$0xff]
        %vm264 = vcmask 130048
        %265 = vst.msk [vmem:[#allocation2] sm:$0xff] %vm264, %v263
        %v266 = vld [vmem:[%s230] sm:$0xff]
        %267 = vst.msk [vmem:[#allocation2 + $0x8] sm:$0xff] %vm264, %v266
        %v268 = vld [vmem:[#allocation2] sm:$0xff]
        %269 = vst.msk [vmem:[#allocation3] sm:$0xff] %vm264, %v268
        %v270 = vld [vmem:[#allocation2 + $0x1] sm:$0xff]
        %272 = vrot.lane.b32.xlu0 %v270, 16
        %v273 = vpop.permute.xlu0 %272
        %vm275 = vcmask 261248
        %276 = vst.msk [vmem:[#allocation3] sm:$0xff] %vm275, %v273
        %v277 = vld [vmem:[#allocation2 + $0x2] sm:$0xff]
        %279 = vrot.lane.b32.xlu0 %v277, 32
        %v280 = vpop.permute.xlu0 %279
        %vm282 = vcmask 392448
        %283 = vst.msk [vmem:[#allocation3] sm:$0xff] %vm282, %v280
        %v284 = vld [vmem:[#allocation2 + $0x3] sm:$0xff]
        %286 = vrot.lane.b32.xlu0 %v284, 48
        %v287 = vpop.permute.xlu0 %286
        %vm289 = vcmask 523648
        %290 = vst.msk [vmem:[#allocation3] sm:$0xff] %vm289, %v287
        %v291 = vld [vmem:[#allocation2 + $0x4] sm:$0xff]
        %293 = vrot.lane.b32.xlu0 %v291, 64
        %v294 = vpop.permute.xlu0 %293
        %vm296 = vcmask 654848
        %297 = vst.msk [vmem:[#allocation3] sm:$0xff] %vm296, %v294
        %v298 = vld [vmem:[#allocation2 + $0x5] sm:$0xff]
        %300 = vrot.lane.b32.xlu0 %v298, 80
        %v301 = vpop.permute.xlu0 %300
        %vm303 = vcmask 786048
        %304 = vst.msk [vmem:[#allocation3] sm:$0xff] %vm303, %v301
        %v305 = vld [vmem:[#allocation2 + $0x6] sm:$0xff]
        %307 = vrot.lane.b32.xlu0 %v305, 96
        %v308 = vpop.permute.xlu0 %307
        %vm310 = vcmask 917248
        %311 = vst.msk [vmem:[#allocation3] sm:$0xff] %vm310, %v308
        %v312 = vld [vmem:[#allocation2 + $0x7] sm:$0xff]
        %314 = vrot.lane.b32.xlu0 %v312, 112
        %v315 = vpop.permute.xlu0 %314
        %vm317 = vcmask 1048448
        %318 = vst.msk [vmem:[#allocation3] sm:$0xff] %vm317, %v315
        %v319 = vld [vmem:[#allocation3] sm:$0xff]
        %v320 = vld [vmem:[#allocation9] sm:$0xff]
        %v321 = vld [vmem:[#allocation9 + $0x8] sm:$0xff]
        %v322 = vld [vmem:[#allocation9 + $0x10] sm:$0xff]
        %v323 = vld [vmem:[#allocation9 + $0x18] sm:$0xff]
        %v324 = vld [vmem:[#allocation9 + $0x20] sm:$0xff]
        %v325 = vld [vmem:[#allocation9 + $0x28] sm:$0xff]
        %v326 = vld [vmem:[#allocation9 + $0x30] sm:$0xff]
        %v327 = vld [vmem:[#allocation9 + $0x38] sm:$0xff]
        %v328 = vld [vmem:[#allocation9 + $0x40] sm:$0xff]
        %v329 = vld [vmem:[#allocation9 + $0x48] sm:$0xff]
        %v330 = vld [vmem:[#allocation9 + $0x50] sm:$0xff]
        %v331 = vld [vmem:[#allocation9 + $0x58] sm:$0xff]
        %v332 = vld [vmem:[#allocation9 + $0x60] sm:$0xff]
        %v333 = vld [vmem:[#allocation9 + $0x68] sm:$0xff]
        %v334 = vld [vmem:[#allocation9 + $0x70] sm:$0xff]
        %v335 = vld [vmem:[#allocation9 + $0x78] sm:$0xff]
        %336 = vmatprep.subr.mxu0 0.0
        %337 = vmatpush1.msra.mxu0 %v320
        %338 = vmatprep.subr.mxu0 0.0
        %339 = vmatpush1.msra.mxu0 %v321
        %340 = vmatprep.subr.mxu0 0.0
        %341 = vmatpush1.msra.mxu0 %v322
        %342 = vmatprep.subr.mxu0 0.0
        %343 = vmatpush1.msra.mxu0 %v323
        %344 = vmatprep.subr.mxu0 0.0
        %345 = vmatpush1.msra.mxu0 %v324
        %346 = vmatprep.subr.mxu0 0.0
        %347 = vmatpush1.msra.mxu0 %v325
        %348 = vmatprep.subr.mxu0 0.0
        %349 = vmatpush1.msra.mxu0 %v326
        %350 = vmatprep.subr.mxu0 0.0
        %351 = vmatpush1.msra.mxu0 %v327
        %352 = vmatprep.subr.mxu0 0.0
        %353 = vmatpush1.msra.mxu0 %v328
        %354 = vmatprep.subr.mxu0 0.0
        %355 = vmatpush1.msra.mxu0 %v329
        %356 = vmatprep.subr.mxu0 0.0
        %357 = vmatpush1.msra.mxu0 %v330
        %358 = vmatprep.subr.mxu0 0.0
        %359 = vmatpush1.msra.mxu0 %v331
        %360 = vmatprep.subr.mxu0 0.0
        %361 = vmatpush1.msra.mxu0 %v332
        %362 = vmatprep.subr.mxu0 0.0
        %363 = vmatpush1.msra.mxu0 %v333
        %364 = vmatprep.subr.mxu0 0.0
        %365 = vmatpush1.msra.mxu0 %v334
        %366 = vmatprep.subr.mxu0 0.0
        %367 = vmatpush1.msra.mxu0 %v335
        %368 = vmatprep.subr.mxu0 0.0
        %369 = vmatpush1.msra.mxu0 0.0
        %370 = vmatprep.subr.mxu0 0.0
        %371 = vmatpush1.msra.mxu0 0.0
        %372 = vmatprep.subr.mxu0 0.0
        %373 = vmatpush1.msra.mxu0 0.0
        %374 = vmatprep.subr.mxu0 0.0
        %375 = vmatpush1.msra.mxu0 0.0
        %376 = vmatprep.subr.mxu0 0.0
        %377 = vmatpush1.msra.mxu0 0.0
        %378 = vmatprep.subr.mxu0 0.0
        %379 = vmatpush1.msra.mxu0 0.0
        %380 = vmatprep.subr.mxu0 0.0
        %381 = vmatpush1.msra.mxu0 0.0
        %382 = vmatprep.subr.mxu0 0.0
        %383 = vmatpush1.msra.mxu0 0.0
        %384 = vmatprep.subr.mxu0 0.0
        %385 = vmatpush1.msra.mxu0 0.0
        %386 = vmatprep.subr.mxu0 0.0
        %387 = vmatpush1.msra.mxu0 0.0
        %388 = vmatprep.subr.mxu0 0.0
        %389 = vmatpush1.msra.mxu0 0.0
        %390 = vmatprep.subr.mxu0 0.0
        %391 = vmatpush1.msra.mxu0 0.0
        %392 = vmatprep.subr.mxu0 0.0
        %393 = vmatpush1.msra.mxu0 0.0
        %394 = vmatprep.subr.mxu0 0.0
        %395 = vmatpush1.msra.mxu0 0.0
        %396 = vmatprep.subr.mxu0 0.0
        %397 = vmatpush1.msra.mxu0 0.0
        %398 = vmatprep.subr.mxu0 0.0
        %399 = vmatpush1.msra.mxu0 0.0
        %400 = vmatprep.mubr.f32.mxu0 0.0
        %401 = vmatmul.mubr.f32.gmra.mrb[0].mxu0 %v319
        %v402 = vpop.f32.mrb[0].mxu0
        %v403 = vadd.f32 0.0, %v402
        %v404 = vpop.f32.mrb[0].mxu0
        %405 = vdwg.mxu0
        %406 = vst [vmem:[%s261] sm:$0xff] %v403
        %s407 = sand.u32 %s124, 1
        %s408 = scalar_lea.sflag [#allocation6], %s407
        %s409 = sand.u32 %s124, 1
        %s410 = smul.addr %s409, 8
        %s411 = scalar_lea.vmem [#allocation10], %s410
        // Predicated region
        $region45: #{tpu_custom_call.1} parent=31 // pred_check
          %p412 = pneg %p134
        $region46: #{tpu_custom_call.1} parent=31 // pred_check_branch
          %414 = sbr.rel (%p412) target = $region48
        $region47: #{tpu_custom_call.1} parent=31 // pred_region
          %s416 = ssub.s32 128, 128
          %417 = vsyncadd %s408, %s416
          %s418 = sadd.s32 %s28, %s27
          %s419 = smul.addr %s418, 128
          %s420 = scalar_lea.hbm %s3, %s419
          %s422 = sshll.u32 %s411, 4
          %s423 = int_to_ptr.vmem [resolvable:$true] %s422
          %425 = dma.vmem_to_hbm [thread:$0]  %s423, 128, %s420, %s408
        $region48: #{tpu_custom_call.1} parent=31 // pred_fallthru
          _
      $region32: #{tpu_custom_call.1} parent=5 // pred_fallthru
        _
      %p426 = scmp.le.s32.totalorder 2, %s18
      // Predicated region
      $region49: #{tpu_custom_call.1} parent=5 // pred_check
        %p427 = pneg %p426
      $region50: #{tpu_custom_call.1} parent=5 // pred_check_branch
        %429 = sbr.rel (%p427) target = $region52
      $region51: #{tpu_custom_call.1} parent=5 // pred_region
        %s430 = ssub.s32 %s18, 2
        // Predicated region
        $region53: #{tpu_custom_call.1} parent=51 // pred_check
          %p431 = pneg %p140
        $region54: #{tpu_custom_call.1} parent=51 // pred_check_branch
          %433 = sbr.rel (%p431) target = $region56
        $region55: #{tpu_custom_call.1} parent=51 // pred_region
          %s434 = sand.u32 %s125, 1
          %s435 = scalar_lea.sflag [#allocation6], %s434
          %s436 = sand.u32 %s125, 1
          %s437 = smul.addr %s436, 8
          %s438 = scalar_lea.vmem [#allocation10], %s437
          %439 = dma.done %s435, 128
        $region56: #{tpu_custom_call.1} parent=51 // pred_fallthru
          _
      $region52: #{tpu_custom_call.1} parent=5 // pred_fallthru
        _
    $region6: #{tpu_custom_call.1} parent=1 // loop_footer
      %s22 = sadd.s32 1, %s18
    $region7: #{tpu_custom_call.1} parent=1 // loop_footer_branch
      %17 = sbr.rel target = $region3
    $region8: #{tpu_custom_call.1} parent=1 // loop_exit
      _
    %440 = vsyncpa [#allocation5], 1
    %s441 = scalar_lea.sflag [#allocation5], 1
    %442 = vsyncpa %s441, 1
    %443 = vsyncpa [#allocation8], 1
    %s444 = scalar_lea.sflag [#allocation8], 1
    %445 = vsyncpa %s444, 1
    %446 = vsyncpa [#allocation6], 1
    %s447 = scalar_lea.sflag [#allocation6], 1
    %448 = vsyncpa %s447, 1

</llo_original>
